<compile_context>
chip_gen: v5e
topology: v5e:2x2
jax: 0.10.0
libtpu: 0.0.40
codegen_flags: <defaults>
</compile_context>

<pallas_src>
import jax
import jax.numpy as jnp
from jax.experimental import pallas as pl
from jax.experimental.pallas import tpu as pltpu

EPSILON = 1e-16


def make_sphere_weight(h, w):
    """Deterministic (h, w) weight matching SphereCE.__init__ (row-constant)."""
    theta = jnp.linspace(0.0, jnp.pi, h + 1)
    dtheta = jnp.pi / h
    dphi = 2.0 * jnp.pi / w
    row = dphi * (jnp.sin(theta[:-1]) + jnp.sin(theta[1:])) / 2.0 * dtheta  # (h,)
    return jnp.broadcast_to(row[:, None], (h, w)).astype(jnp.float32)


def sphere_ce(out, target, weight_hw, *, target_block_bytes=4 << 20, n_par=2):
    """out, target: (B, C, H, W); weight_hw: (H, W). Returns scalar f32 loss."""
    B, C, H, W = out.shape
    BC, HW = B * C, H * W

    # Keep native dtype (cast to f32 inside the kernel) -> no extra HBM copies.
    o2 = out.reshape(BC, HW)
    t2 = target.reshape(BC, HW)
    w2 = weight_hw.reshape(1, HW).astype(jnp.float32)

    itemsize = jnp.dtype(o2.dtype).itemsize

    # Rows per block: ~target_block_bytes per streamed input block, multiple of
    # 8 (sublane), never larger than the (rounded-up) total row count.
    rows_for_budget = max(8, (target_block_bytes // (HW * itemsize)) // 8 * 8)
    rows_total_rounded = ((BC + 7) // 8) * 8
    tile_bc = int(min(rows_for_budget, rows_total_rounded))
    # TODO(synk): for very large H*W (equirect panoramas) add a second
    # "arbitrary" grid axis over HW (tile_hw multiple of 128, weight indexed by
    # the hw tile) so a block still fits v7x's 64 MiB VMEM.

    total_tiles = -(-BC // tile_bc)           # cdiv over the row axis
    n_par = max(1, min(n_par, total_tiles))   # don't over-split tiny inputs
    n_k = -(-total_tiles // n_par)            # row-tiles per parallel slice

    def kernel(o_ref, t_ref, w_ref, out_ref, acc_ref):
        p = pl.program_id(0)
        k = pl.program_id(1)

        @pl.when(k == 0)
        def _():
            acc_ref[...] = jnp.zeros_like(acc_ref)

        o = o_ref[...].astype(jnp.float32)          # (tile_bc, HW)
        t = t_ref[...].astype(jnp.float32)          # (tile_bc, HW)
        w = w_ref[...]                              # (1, HW), broadcasts over rows
        loss = -t * jnp.log(jnp.clip(o, EPSILON, 1.0)) * w

        # Mask rows beyond B*C (tail of the last tile / over-provisioned
        # parallel slices that got clamped to the last valid block).
        tile_idx = p * n_k + k
        row = jax.lax.broadcasted_iota(jnp.int32, (tile_bc, 1), 0)
        valid = (tile_idx * tile_bc + row) < BC
        loss = jnp.where(valid, loss, 0.0)

        # Layout-preserving partial reduction: fold groups of 8 rows together
        # (pure elementwise vreg adds) into the resident (8, HW) accumulator.
        acc_ref[...] += loss.reshape(tile_bc // 8, 8, HW).sum(axis=0)

        @pl.when(k == pl.num_programs(1) - 1)
        def _():
            out_ref[...] = jnp.sum(acc_ref[...]).reshape(1, 1, 1)

    def big_index_map(p, k):
        # Clamp so over-provisioned (p, k) slots re-read the last valid block;
        # their contribution is masked to zero in the kernel.
        return (jnp.minimum(p * n_k + k, total_tiles - 1), 0)

    partials = pl.pallas_call(
        kernel,
        out_shape=jax.ShapeDtypeStruct((n_par, 1, 1), jnp.float32),
        grid_spec=pltpu.PrefetchScalarGridSpec(
            num_scalar_prefetch=0,
            grid=(n_par, n_k),
            in_specs=[
                pl.BlockSpec((tile_bc, HW), big_index_map),
                pl.BlockSpec((tile_bc, HW), big_index_map),
                pl.BlockSpec((1, HW), lambda p, k: (0, 0)),
            ],
            out_specs=pl.BlockSpec((1, 1, 1), lambda p, k: (p, 0, 0)),
            scratch_shapes=[pltpu.VMEM((8, HW), jnp.float32)],
        ),
        compiler_params=pltpu.CompilerParams(
            dimension_semantics=("parallel", "arbitrary")),
    )(o2, t2, w2)

    return jnp.sum(partials) / jnp.float32(B)


def sphere_ce_ref(out, target, weight_hw):
    """Pure-JAX reference for validation."""
    w = weight_hw[None, None, :, :]
    loss = -target.astype(jnp.float32) * jnp.log(
        jnp.clip(out.astype(jnp.float32), EPSILON, 1.0)) * w
    return jnp.sum(loss) / out.shape[0]


def _make_inputs(key, B, C, H, W):
    k1, k2 = jax.random.split(key)
    out = jax.random.uniform(k1, (B, C, H, W), dtype=jnp.float32,
                             minval=1e-4, maxval=1.0)
    target = jax.random.uniform(k2, (B, C, H, W), dtype=jnp.float32)
    return out, target


if __name__ == "__main__":
    key = jax.random.PRNGKey(0)
    H, W = 16, 16
    weight_hw = make_sphere_weight(H, W)

    # 1) Base case (single tile, single parallel slice).
    k0, k1, k2 = jax.random.split(key, 3)
    out, target = _make_inputs(k0, 2, 4, H, W)
    loss = jax.block_until_ready(sphere_ce(out, target, weight_hw))
    ref = jax.block_until_ready(sphere_ce_ref(out, target, weight_hw))
    assert jnp.allclose(loss, ref, rtol=1e-5, atol=1e-5), (loss, ref)

    # 2) Row count not a multiple of 8 -> exercises the in-kernel tail mask.
    out, target = _make_inputs(k1, 3, 5, H, W)
    loss = jax.block_until_ready(sphere_ce(out, target, weight_hw))
    ref = jax.block_until_ready(sphere_ce_ref(out, target, weight_hw))
    assert jnp.allclose(loss, ref, rtol=1e-5, atol=1e-5), (loss, ref)

    # 3) Many tiles + 2-way parallel split with an uneven tile count
    #    (exercises the clamped index map and per-slice partial sums).
    out, target = _make_inputs(k2, 3, 24, H, W)     # BC = 72 rows
    loss = jax.block_until_ready(
        sphere_ce(out, target, weight_hw, target_block_bytes=8192, n_par=2))
    ref = jax.block_until_ready(sphere_ce_ref(out, target, weight_hw))
    assert jnp.allclose(loss, ref, rtol=1e-5, atol=1e-5), (loss, ref)

    print("KERNEL_OK")
</pallas_src>

<mosaic_0001>
module attributes {stable_mosaic.version = 11 : i64} {
  func.func @kernel(%arg0: i32, %arg1: i32, %arg2: memref<8x256xf32, #tpu.memory_space<vmem>>, %arg3: memref<8x256xf32, #tpu.memory_space<vmem>>, %arg4: memref<1x256xf32, #tpu.memory_space<vmem>>, %arg5: memref<1x1x1xf32, #tpu.memory_space<vmem>>, %arg6: memref<8x256xf32, #tpu.memory_space<vmem>>) attributes {dimension_semantics = [#tpu.dimension_semantics<parallel>, #tpu.dimension_semantics<arbitrary>], iteration_bounds = array<i64: 1, 1>, scalar_prefetch = 0 : i64, scratch_operands = 1 : i64, tpu.core_type = #tpu.core_type<tc>, window_params = [{transform_indices = @transform_0, window_bounds = array<i64: 8, 256>}, {transform_indices = @transform_1, window_bounds = array<i64: 8, 256>}, {pipeline_mode = #tpu.pipeline_mode<synchronous>, transform_indices = @transform_2, window_bounds = array<i64: 1, 256>}, {transform_indices = @transform_3, window_bounds = array<i64: 1, 1, 1>}]} {
    %c0_i32 = arith.constant 0 : i32
    %0 = arith.cmpi eq, %arg1, %c0_i32 : i32
    %1 = arith.extui %0 : i1 to i32
    %c0_i32_0 = arith.constant 0 : i32
    %2 = arith.cmpi ne, %1, %c0_i32_0 : i32
    scf.if %2 {
      %cst_17 = arith.constant 0.000000e+00 : f32
      %36 = vector.broadcast %cst_17 : f32 to vector<8x256xf32>
      %c0_18 = arith.constant 0 : index
      %c0_19 = arith.constant 0 : index
      %37 = vector.load %arg6[%c0_18, %c0_19] : memref<8x256xf32, #tpu.memory_space<vmem>>, vector<8x256xf32>
      tpu.vector_store %arg6[%c0_18, %c0_19], %36 {strides = array<i32>} : memref<8x256xf32, #tpu.memory_space<vmem>>, vector<8x256xf32>,
    } else {
    }
    %c0 = arith.constant 0 : index
    %c0_1 = arith.constant 0 : index
    %3 = vector.load %arg2[%c0, %c0_1] : memref<8x256xf32, #tpu.memory_space<vmem>>, vector<8x256xf32>
    %c0_2 = arith.constant 0 : index
    %c0_3 = arith.constant 0 : index
    %4 = vector.load %arg3[%c0_2, %c0_3] : memref<8x256xf32, #tpu.memory_space<vmem>>, vector<8x256xf32>
    %c0_4 = arith.constant 0 : index
    %c0_5 = arith.constant 0 : index
    %5 = vector.load %arg4[%c0_4, %c0_5] : memref<1x256xf32, #tpu.memory_space<vmem>>, vector<1x256xf32>
    %cst = arith.constant 0.000000e+00 : f32
    %6 = vector.broadcast %cst : f32 to vector<8x256xf32>
    %7 = arith.subf %6, %4 : vector<8x256xf32>
    %cst_6 = arith.constant 1.000000e-16 : f32
    %cst_7 = arith.constant 1.000000e+00 : f32
    %8 = vector.broadcast %cst_6 : f32 to vector<8x256xf32>
    %9 = arith.maximumf %8, %3 : vector<8x256xf32>
    %10 = vector.broadcast %cst_7 : f32 to vector<8x256xf32>
    %11 = arith.minimumf %10, %9 : vector<8x256xf32>
    %12 = math.log %11 : vector<8x256xf32>
    %13 = arith.mulf %7, %12 : vector<8x256xf32>
    %14 = vector.broadcast %5 : vector<1x256xf32> to vector<8x256xf32>
    %15 = arith.mulf %13, %14 : vector<8x256xf32>
    %c1_i32 = arith.constant 1 : i32
    %16 = arith.muli %arg0, %c1_i32 : i32
    %17 = arith.addi %16, %arg1 : i32
    %18 = tpu.iota {dimensions = array<i32: 0>} : vector<8x1xi32>
    %c8_i32 = arith.constant 8 : i32
    %19 = arith.muli %17, %c8_i32 : i32
    %20 = vector.broadcast %19 : i32 to vector<8x1xi32>
    %21 = arith.addi %20, %18 : vector<8x1xi32>
    %c8_i32_8 = arith.constant 8 : i32
    %22 = vector.broadcast %c8_i32_8 : i32 to vector<8x1xi32>
    %23 = arith.cmpi slt, %21, %22 : vector<8x1xi32>
    %cst_9 = arith.constant 0.000000e+00 : f32
    %24 = vector.shape_cast %23 : vector<8x1xi1> to vector<8x1xi1>
    %25 = vector.broadcast %24 : vector<8x1xi1> to vector<8x256xi1>
    %26 = vector.broadcast %cst_9 : f32 to vector<8x256xf32>
    %27 = arith.select %25, %15, %26 : vector<8x256xi1>, vector<8x256xf32>
    %c0_10 = arith.constant 0 : index
    %c0_11 = arith.constant 0 : index
    %28 = vector.load %arg6[%c0_10, %c0_11] : memref<8x256xf32, #tpu.memory_space<vmem>>, vector<8x256xf32>
    %29 = vector.shape_cast %27 : vector<8x256xf32> to vector<1x8x256xf32>
    %cst_12 = arith.constant dense<0.000000e+00> : vector<8x256xf32>
    %30 = vector.multi_reduction <add>, %29, %cst_12 [0] : vector<1x8x256xf32> to vector<8x256xf32>
    %31 = arith.addf %28, %30 : vector<8x256xf32>
    %c0_13 = arith.constant 0 : index
    %c0_14 = arith.constant 0 : index
    %32 = vector.load %arg6[%c0_13, %c0_14] : memref<8x256xf32, #tpu.memory_space<vmem>>, vector<8x256xf32>
    tpu.vector_store %arg6[%c0_13, %c0_14], %31 {strides = array<i32>} : memref<8x256xf32, #tpu.memory_space<vmem>>, vector<8x256xf32>,
    %c0_i32_15 = arith.constant 0 : i32
    %33 = arith.cmpi eq, %arg1, %c0_i32_15 : i32
    %34 = arith.extui %33 : i1 to i32
    %c0_i32_16 = arith.constant 0 : i32
    %35 = arith.cmpi ne, %34, %c0_i32_16 : i32
    scf.if %35 {
      %c0_17 = arith.constant 0 : index
      %c0_18 = arith.constant 0 : index
      %36 = vector.load %arg6[%c0_17, %c0_18] : memref<8x256xf32, #tpu.memory_space<vmem>>, vector<8x256xf32>
      %37 = vector.shape_cast %36 : vector<8x256xf32> to vector<1x8x256xf32>
      %cst_19 = arith.constant dense<0.000000e+00> : vector<1xf32>
      %38 = vector.multi_reduction <add>, %37, %cst_19 [1, 2] : vector<1x8x256xf32> to vector<1xf32>
      %39 = vector.shape_cast %38 : vector<1xf32> to vector<1x1x1xf32>
      %40 = vector.extract %39[0, 0, 0] : f32 from vector<1x1x1xf32>
      %41 = vector.broadcast %40 : f32 to vector<1x1x1xf32>
      %c0_20 = arith.constant 0 : index
      %c0_21 = arith.constant 0 : index
      %c0_22 = arith.constant 0 : index
      %42 = vector.load %arg5[%c0_20, %c0_21, %c0_22] : memref<1x1x1xf32, #tpu.memory_space<vmem>>, vector<1x1x1xf32>
      tpu.vector_store %arg5[%c0_20, %c0_21, %c0_22], %41 {strides = array<i32>} : memref<1x1x1xf32, #tpu.memory_space<vmem>>, vector<1x1x1xf32>,
    } else {
    }
    return
  }
  func.func @transform_0(%arg0: i32, %arg1: i32) -> (i32, i32) {
    %c1_i32 = arith.constant 1 : i32
    %0 = arith.muli %arg0, %c1_i32 : i32
    %1 = arith.addi %0, %arg1 : i32
    %c0_i32 = arith.constant 0 : i32
    %2 = arith.minsi %1, %c0_i32 : i32
    %c0_i32_0 = arith.constant 0 : i32
    %c0_i32_1 = arith.constant 0 : i32
    return %2, %c0_i32_0 : i32, i32
  }
  func.func @transform_1(%arg0: i32, %arg1: i32) -> (i32, i32) {
    %c1_i32 = arith.constant 1 : i32
    %0 = arith.muli %arg0, %c1_i32 : i32
    %1 = arith.addi %0, %arg1 : i32
    %c0_i32 = arith.constant 0 : i32
    %2 = arith.minsi %1, %c0_i32 : i32
    %c0_i32_0 = arith.constant 0 : i32
    %c0_i32_1 = arith.constant 0 : i32
    return %2, %c0_i32_0 : i32, i32
  }
  func.func @transform_2(%arg0: i32, %arg1: i32) -> (i32, i32) {
    %c0_i32 = arith.constant 0 : i32
    %c0_i32_0 = arith.constant 0 : i32
    %c0_i32_1 = arith.constant 0 : i32
    return %c0_i32, %c0_i32_0 : i32, i32
  }
  func.func @transform_3(%arg0: i32, %arg1: i32) -> (i32, i32, i32) {
    %c0_i32 = arith.constant 0 : i32
    %c0_i32_0 = arith.constant 0 : i32
    %c0_i32_1 = arith.constant 0 : i32
    return %arg0, %c0_i32, %c0_i32_0 : i32, i32, i32
  }
}

</mosaic_0001>

<llo_original>
// kernel: tpu_custom_call.1
$region0: #{tpu_custom_call.1}
  #allocation0 [shape = 'u32[]', space=smem, size = 0x4, offset = 0x4, fixed_abs, tag = 'smem constant byte address 0x4 - core index']
  #allocation1 [shape = 'u32[72,128]{1,0:T(1,128)}', space=vmem, size = 0x9000, scoped, tag = 'internal scratch']
  #allocation2 [shape = 'f32[8,256]{1,0:T(8,128)}', space=vmem, size = 0x2000, scoped, tag = 'scratch operand']
  %s0 = inlined_call_operand.hbm [shape: f32[8,256], index: 0, kind: input, shape index: {}]
  %s1 = inlined_call_operand.hbm [shape: f32[8,256], index: 1, kind: input, shape index: {}]
  %s2 = inlined_call_operand.hbm [shape: f32[1,256], index: 2, kind: input, shape index: {}]
  %s3 = inlined_call_operand.hbm [shape: f32[1,1,1], index: 3, kind: output, shape index: {}]
  %s4 = sld [smem:[#allocation0]]
  $region42: #{tpu_custom_call.1} parent=0
    _
  %s6 = ssub.s32 1, %s4
  %s7 = scalar_select 0, %s6, %s4
  $region1: #{tpu_custom_call.1} parent=0
    #allocation3 [shape = 'u8[8192]{0}', space=vmem, size = 0x2000, scoped, tag = 'input window, operand 0, single buffered']
    #allocation4 [shape = 's32[1]{0}', space=sflag, size = 0x4, scoped, tag = 'scoped memory for tpu_custom_call.1']
    #allocation5 [shape = 's32[1]{0}', space=sflag, size = 0x4, scoped, tag = 'scoped memory for tpu_custom_call.1']
    #allocation6 [shape = 'u8[8192]{0}', space=vmem, size = 0x2000, scoped, tag = 'input window, operand 1, single buffered']
    #allocation7 [shape = 's32[1]{0}', space=sflag, size = 0x4, scoped, tag = 'scoped memory for tpu_custom_call.1']
    #allocation8 [shape = 'u8[1024]{0}', space=vmem, size = 0x400, scoped, tag = 'input window, operand 2, single buffered']
    #allocation9 [shape = 'u8[512]{0}', space=vmem, size = 0x400, scoped, tag = 'output window, operand 0, single buffered']
    %8 = vsyncpa [#allocation4], 0
    %9 = vsyncpa [#allocation7], 0
    %10 = vsyncpa [#allocation5], 0
    // Predicated region
    $region2: #{tpu_custom_call.1} parent=1 // pred_check
      _
    $region3: #{tpu_custom_call.1} parent=1 // pred_check_branch
      %12 = sbr.rel (0) target = $region5
    $region4: #{tpu_custom_call.1} parent=1 // pred_region
      %s13 = sadd.s32 0, 0
      %p14 = scmp.lt.s32.totalorder %s13, 0
      %s15 = scalar_select %p14, %s13, 0
      %17 = vsyncadd [#allocation4], 0
      %s18 = smul.addr %s15, 2
      %s19 = smul.addr %s18, 8
      %s20 = scalar_lea.hbm %s0, %s19
      %s22 = sshll.u32 %s20, 4
      %s23 = int_to_ptr.hbm [resolvable:$true] %s22
      %s24 = sshll.u32 [#allocation3], 4
      %s25 = int_to_ptr.vmem [resolvable:$true] %s24
      %27 = dma.hbm_to_vmem [thread:$0]  %s23, 256, %s25, [#allocation4]
    $region5: #{tpu_custom_call.1} parent=1 // pred_fallthru
      _
    // Predicated region
    $region6: #{tpu_custom_call.1} parent=1 // pred_check
      _
    $region7: #{tpu_custom_call.1} parent=1 // pred_check_branch
      %29 = sbr.rel (0) target = $region9
    $region8: #{tpu_custom_call.1} parent=1 // pred_region
      %s30 = sadd.s32 0, 0
      %p31 = scmp.lt.s32.totalorder %s30, 0
      %s32 = scalar_select %p31, %s30, 0
      %34 = vsyncadd [#allocation7], 0
      %s35 = smul.addr %s32, 2
      %s36 = smul.addr %s35, 8
      %s37 = scalar_lea.hbm %s1, %s36
      %s39 = sshll.u32 %s37, 4
      %s40 = int_to_ptr.hbm [resolvable:$true] %s39
      %s41 = sshll.u32 [#allocation6], 4
      %s42 = int_to_ptr.vmem [resolvable:$true] %s41
      %44 = dma.hbm_to_vmem [thread:$0]  %s40, 256, %s42, [#allocation7]
    $region9: #{tpu_custom_call.1} parent=1 // pred_fallthru
      _
    // Predicated region
    $region10: #{tpu_custom_call.1} parent=1 // pred_check
      _
    $region11: #{tpu_custom_call.1} parent=1 // pred_check_branch
      %46 = sbr.rel (0) target = $region13
    $region12: #{tpu_custom_call.1} parent=1 // pred_region
      %48 = vsyncadd [#allocation7], 0
      %s50 = sshll.u32 %s2, 4
      %s51 = int_to_ptr.hbm [resolvable:$true] %s50
      %s52 = sshll.u32 [#allocation8], 4
      %s53 = int_to_ptr.vmem [resolvable:$true] %s52
      %55 = dma.hbm_to_vmem [thread:$0]  %s51, 32, %s53, [#allocation7]
    $region13: #{tpu_custom_call.1} parent=1 // pred_fallthru
      _
    // Predicated region
    $region14: #{tpu_custom_call.1} parent=1 // pred_check
      _
    $region15: #{tpu_custom_call.1} parent=1 // pred_check_branch
      %57 = sbr.rel (0) target = $region17
    $region16: #{tpu_custom_call.1} parent=1 // pred_region
      %59 = dma.done [#allocation4], 256
    $region17: #{tpu_custom_call.1} parent=1 // pred_fallthru
      _
    // Predicated region
    $region18: #{tpu_custom_call.1} parent=1 // pred_check
      _
    $region19: #{tpu_custom_call.1} parent=1 // pred_check_branch
      %61 = sbr.rel (0) target = $region21
    $region20: #{tpu_custom_call.1} parent=1 // pred_region
      %63 = dma.done [#allocation7], 256
    $region21: #{tpu_custom_call.1} parent=1 // pred_fallthru
      _
    // Predicated region
    $region22: #{tpu_custom_call.1} parent=1 // pred_check
      _
    $region23: #{tpu_custom_call.1} parent=1 // pred_check_branch
      %65 = sbr.rel (0) target = $region25
    $region24: #{tpu_custom_call.1} parent=1 // pred_region
      %67 = dma.done [#allocation7], 32
    $region25: #{tpu_custom_call.1} parent=1 // pred_fallthru
      _
    %s68 = sadd.s32 0, 0
    %p69 = scmp.lt.s32.totalorder %s68, 0
    %s70 = scalar_select %p69, %s68, 0
    %s71 = sadd.s32 0, 0
    %p72 = scmp.lt.s32.totalorder %s71, 0
    %s73 = scalar_select %p72, %s71, 0
    %p74 = scmp.eq.s32.totalorder 0, 0
    // Predicated region
    $region26: #{tpu_custom_call.1} parent=1 // pred_check
      %p75 = pneg %p74
    $region27: #{tpu_custom_call.1} parent=1 // pred_check_branch
      %77 = sbr.rel (%p75) target = $region29
    $region28: #{tpu_custom_call.1} parent=1 // pred_region
      %78 = vst [vmem:[#allocation2] sm:$0xff] 0.0
      %79 = vst [vmem:[#allocation2 + $0x8] sm:$0xff] 0.0
    $region29: #{tpu_custom_call.1} parent=1 // pred_fallthru
      _
    %v80 = vld [vmem:[#allocation3] sm:$0xff]
    %v81 = vld [vmem:[#allocation3 + $0x8] sm:$0xff]
    %v82 = vld [vmem:[#allocation6] sm:$0xff]
    %v83 = vld [vmem:[#allocation6 + $0x8] sm:$0xff]
    %v84 = vld [vmem:[#allocation8] sm:$0x3]
    %v85 = vsub.f32 0.0, %v82
    %v86 = vsub.f32 0.0, %v83
    %v87 = vmax.f32 %v80, 1e-16
    %v88 = vmax.f32 %v81, 1e-16
    %v89 = vmin.f32 %v87, 1.0
    %v90 = vmin.f32 %v88, 1.0
    %v91 = vlog2.pop %v89
    %v92 = vmul.f32 %v91, 0.6931472
    %v93 = vlog2.pop %v90
    %v94 = vmul.f32 %v93, 0.6931472
    %v95 = vmul.f32 %v85, %v92
    %v96 = vmul.f32 %v86, %v94
    %v98 = vperm.slane %v84, 0
    %v99 = vperm.slane %v84, 1
    %v102 = vmul.f32 %v95, %v98
    %v103 = vmul.f32 %v96, %v99
    %s104 = sadd.s32 0, 0
    %v105 = vlaneseq
    %v106 = vshrl.u32 %v105, 7
    %s107 = smul.u32 %s104, 8
    %v108 = vstv %s107
    %v109 = vadd.s32 %v108, %v106
    %vm110 = vcmp.lt.s32.totalorder %v109, 8
    %v111 = vsel %vm110, 1, 0
    %vm112 = vcmp.eq.s32.totalorder %v111, 1
    %v113 = vsel %vm112, %v102, 0.0
    %v114 = vsel %vm112, %v103, 0.0
    %v115 = vld [vmem:[#allocation2] sm:$0xff]
    %v116 = vld [vmem:[#allocation2 + $0x8] sm:$0xff]
    %v117 = vadd.f32 %v113, 0.0
    %v118 = vadd.f32 %v114, 0.0
    %v119 = vadd.f32 %v115, %v117
    %v120 = vadd.f32 %v116, %v118
    %121 = vst [vmem:[#allocation2] sm:$0xff] %v119
    %122 = vst [vmem:[#allocation2 + $0x8] sm:$0xff] %v120
    // Predicated region
    $region30: #{tpu_custom_call.1} parent=1 // pred_check
      %p123 = pneg %p74
    $region31: #{tpu_custom_call.1} parent=1 // pred_check_branch
      %125 = sbr.rel (%p123) target = $region33
    $region32: #{tpu_custom_call.1} parent=1 // pred_region
      %v126 = vld [vmem:[#allocation2] sm:$0xff]
      %v127 = vld [vmem:[#allocation2 + $0x8] sm:$0xff]
      %v128 = vadd.f32 %v126, %v127
      %129 = vadd.xlane.f32.xlu0 %v128
      %v130 = vpop.xlane.xlu0 %129
      %v131 = vrot.slane %v130, 4
      %v132 = vadd.f32 %v130, %v131
      %v133 = vrot.slane %v132, 2
      %v134 = vadd.f32 %v132, %v133
      %v135 = vrot.slane %v134, 1
      %v136 = vadd.f32 %v134, %v135
      %s137 = vtos %v136
      %v138 = vstv %s137
      %vm139 = vcmask 0
      %140 = vst.msk [vmem:[#allocation9] sm:$0x1] %vm139, %v138
    $region33: #{tpu_custom_call.1} parent=1 // pred_fallthru
      _
    // Predicated region
    $region34: #{tpu_custom_call.1} parent=1 // pred_check
      _
    $region35: #{tpu_custom_call.1} parent=1 // pred_check_branch
      %142 = sbr.rel (0) target = $region37
    $region36: #{tpu_custom_call.1} parent=1 // pred_region
      %144 = vsyncadd [#allocation5], 0
      %s146 = sshll.u32 [#allocation9], 4
      %s147 = int_to_ptr.vmem [resolvable:$true] %s146
      %s148 = sshll.u32 %s3, 4
      %s149 = int_to_ptr.hbm [resolvable:$true] %s148
      %151 = dma.vmem_to_hbm [thread:$0]  %s147, 16, %s149, [#allocation5]
    $region37: #{tpu_custom_call.1} parent=1 // pred_fallthru
      _
    // Predicated region
    $region38: #{tpu_custom_call.1} parent=1 // pred_check
      _
    $region39: #{tpu_custom_call.1} parent=1 // pred_check_branch
      %153 = sbr.rel (0) target = $region41
    $region40: #{tpu_custom_call.1} parent=1 // pred_region
      %155 = dma.done [#allocation5], 16
    $region41: #{tpu_custom_call.1} parent=1 // pred_fallthru
      _
    %156 = vsyncpa [#allocation4], 1
    %157 = vsyncpa [#allocation7], 1
    %158 = vsyncpa [#allocation5], 1

</llo_original>
